<compile_context>
chip_gen: v7x
topology: tpu7x:2x2x1
jax: 0.10.0
libtpu: 0.0.40
codegen_flags: <defaults>
</compile_context>

<pallas_src>
import jax
import jax.numpy as jnp
from jax.experimental import pallas as pl
from jax.experimental.pallas import tpu as pltpu


def mlp_kernel(x_ref, w1_ref, b1_ref, w2_ref, b2_ref, w3_ref, b3_ref, o_ref):
    # MXU-input dtype follows the (possibly bf16) weights; accumulate in f32,
    # bias + ReLU epilogue in f32 (v5e-safe).
    cdt = w1_ref.dtype
    b1 = b1_ref[...].astype(jnp.float32)
    b2 = b2_ref[...].astype(jnp.float32)
    b3 = b3_ref[...].astype(jnp.float32)

    # fc1 + ReLU
    h1 = jnp.dot(x_ref[...].astype(cdt), w1_ref[...],
                 preferred_element_type=jnp.float32)
    h1 = jnp.maximum(h1 + b1, 0.0)
    # fc2 + ReLU
    h2 = jnp.dot(h1.astype(cdt), w2_ref[...],
                 preferred_element_type=jnp.float32)
    h2 = jnp.maximum(h2 + b2, 0.0)
    # output layer (no activation)
    out = jnp.dot(h2.astype(cdt), w3_ref[...],
                  preferred_element_type=jnp.float32)
    o_ref[...] = (out + b3).astype(o_ref.dtype)


def _round_up(n, m):
    return -(-n // m) * m


def prepare_params(params, compute_dtype=None):
    """One-time weight preparation (optional MXU-input cast).

    Call once and reuse the result for every forward, so no per-call XLA
    pad/cast launches sit next to the (sub-10us) Pallas kernel.
    Biases stay f32: the bias+ReLU epilogue runs in f32 on all generations.
    """
    p = dict(params)
    if compute_dtype is not None:
        for k in ("w1", "w2", "w3"):
            p[k] = p[k].astype(compute_dtype)
    return p


def _pick_tb(batch_rounded, sub):
    """Batch tile (rows per grid step).

    <=128 rows: one grid step, zero extra padding (best on 1-TC v5e/v6e,
    and too small to split anyway). Larger batches: >=2 steps so the
    "parallel" batch axis can shard across both v7x TensorCores, while
    keeping batch padding minimal and per-step rows <= 256.
    """
    if batch_rounded <= 128:
        return batch_rounded
    half = _round_up(-(-batch_rounded // 2), sub)
    if half <= 256:
        return half  # exactly 2 steps, at most `sub` padded rows
    # Big batches: fixed tiles; pick the candidate minimizing padded rows,
    # tie-breaking toward the larger tile (fewer steps).
    return min(((_round_up(batch_rounded, tb) - batch_rounded, -tb, tb)
                for tb in (128, 256)))[2]


def dqn_forward(x, params, *, compute_dtype=None):
    """Fused 3-layer MLP forward in a single Pallas kernel.

    x: (B, input_dim) float32
    params: dict with w1 (D,H1), b1 (1,H1), w2 (H1,H2), b2 (1,H2),
            w3 (H2,O), b3 (1,O) — ideally pre-processed by `prepare_params`.
    compute_dtype: optional MXU-input dtype (e.g. jnp.bfloat16 on v6e/v7x).
            The x cast happens inside the kernel; accumulation stays f32.
    """
    w1, b1 = params["w1"], params["b1"]
    w2, b2 = params["w2"], params["b2"]
    w3, b3 = params["w3"], params["b3"]
    B, D = x.shape
    H1 = w1.shape[1]
    H2 = w2.shape[1]
    O = w3.shape[1]

    sub = 16 if compute_dtype == jnp.bfloat16 else 8
    B8 = _round_up(B, sub)
    TB = _pick_tb(B8, sub)
    B_p = _round_up(B8, TB)

    # Only the batch dim is ever padded, and only when needed.
    xp = x if B_p == B else jnp.pad(x, ((0, B_p - B), (0, 0)))

    const2 = lambda i: (0, 0)  # weights/biases: VMEM-resident across the grid
    out = pl.pallas_call(
        mlp_kernel,
        out_shape=jax.ShapeDtypeStruct((B_p, O), x.dtype),
        grid=(B_p // TB,),
        in_specs=[
            pl.BlockSpec((TB, D), lambda i: (i, 0)),   # x: tiled over batch
            pl.BlockSpec((D, H1), const2),             # w1
            pl.BlockSpec((1, H1), const2),             # b1
            pl.BlockSpec((H1, H2), const2),            # w2
            pl.BlockSpec((1, H2), const2),             # b2
            pl.BlockSpec((H2, O), const2),             # w3
            pl.BlockSpec((1, O), const2),              # b3
        ],
        out_specs=pl.BlockSpec((TB, O), lambda i: (i, 0)),
        compiler_params=pltpu.CompilerParams(
            dimension_semantics=("parallel",),  # shard batch steps on v7x's 2 TCs
        ),
    )(xp, w1, b1, w2, b2, w3, b3)

    return out if B_p == B else out[:B]


def xavier_uniform(key, fan_in, fan_out, dtype=jnp.float32):
    # Matches torch.nn.init.xavier_uniform_ bounds (gain = 1).
    bound = jnp.sqrt(6.0 / (fan_in + fan_out))
    # PyTorch weight is (fan_out, fan_in); we store its transpose (fan_in, fan_out).
    return jax.random.uniform(key, (fan_in, fan_out), dtype,
                              minval=-bound, maxval=bound)


def init_params(key, input_dim, out_dim, hidden1=128, hidden2=128):
    k1, k2, k3 = jax.random.split(key, 3)
    return {
        "w1": xavier_uniform(k1, input_dim, hidden1),
        "b1": jnp.zeros((1, hidden1), jnp.float32),
        "w2": xavier_uniform(k2, hidden1, hidden2),
        "b2": jnp.zeros((1, hidden2), jnp.float32),
        "w3": xavier_uniform(k3, hidden2, out_dim),
        "b3": jnp.zeros((1, out_dim), jnp.float32),
    }


def reference_forward(x, p):
    h1 = jnp.maximum(x @ p["w1"] + p["b1"], 0.0)
    h2 = jnp.maximum(h1 @ p["w2"] + p["b2"], 0.0)
    return h2 @ p["w3"] + p["b3"]


if __name__ == "__main__":
    key = jax.random.PRNGKey(0)
    k_params, k_x1, k_x2, k_x3 = jax.random.split(key, 4)

    input_dim, out_dim = 32, 4
    params = init_params(k_params, input_dim, out_dim, hidden1=128, hidden2=128)
    # One-time weight prep (f32 here; pass compute_dtype=jnp.bfloat16 on v6e/v7x).
    prepared = prepare_params(params, compute_dtype=None)

    # Action-selection-style batch: single grid step, no padding at all.
    x_small = jax.random.normal(k_x1, (8, input_dim), jnp.float32)
    out_small = jax.block_until_ready(dqn_forward(x_small, prepared))
    ref_small = reference_forward(x_small, params)
    assert out_small.shape == (8, out_dim)
    assert jnp.allclose(out_small, ref_small, atol=1e-4, rtol=1e-4), \
        "mismatch vs reference (small batch)"

    # Ragged batch: exercises batch padding + 2-step grid (B=300 -> TB=152).
    x_mid = jax.random.normal(k_x2, (300, input_dim), jnp.float32)
    out_mid = jax.block_until_ready(dqn_forward(x_mid, prepared))
    ref_mid = reference_forward(x_mid, params)
    assert out_mid.shape == (300, out_dim)
    assert jnp.allclose(out_mid, ref_mid, atol=1e-4, rtol=1e-4), \
        "mismatch vs reference (ragged batch)"

    # Replay-sized batch: 2 grid steps of 256, no padding, no slicing.
    x_big = jax.random.normal(k_x3, (512, input_dim), jnp.float32)
    out_big = jax.block_until_ready(dqn_forward(x_big, prepared))
    ref_big = reference_forward(x_big, params)
    assert out_big.shape == (512, out_dim)
    assert jnp.allclose(out_big, ref_big, atol=1e-4, rtol=1e-4), \
        "mismatch vs reference (batch grid)"

    print("KERNEL_OK")
</pallas_src>

<mosaic_0001>
module attributes {stable_mosaic.version = 11 : i64} {
  func.func @mlp_kernel(%arg0: i32, %arg1: memref<8x32xf32, #tpu.memory_space<vmem>>, %arg2: memref<32x128xf32, #tpu.memory_space<vmem>>, %arg3: memref<1x128xf32, #tpu.memory_space<vmem>>, %arg4: memref<128x128xf32, #tpu.memory_space<vmem>>, %arg5: memref<1x128xf32, #tpu.memory_space<vmem>>, %arg6: memref<128x4xf32, #tpu.memory_space<vmem>>, %arg7: memref<1x4xf32, #tpu.memory_space<vmem>>, %arg8: memref<8x4xf32, #tpu.memory_space<vmem>>) attributes {dimension_semantics = [#tpu.dimension_semantics<parallel>], iteration_bounds = array<i64: 1>, scalar_prefetch = 0 : i64, scratch_operands = 0 : i64, tpu.core_type = #tpu.core_type<tc>, window_params = [{transform_indices = @transform_0, window_bounds = array<i64: 8, 32>}, {pipeline_mode = #tpu.pipeline_mode<synchronous>, transform_indices = @transform_1, window_bounds = array<i64: 32, 128>}, {pipeline_mode = #tpu.pipeline_mode<synchronous>, transform_indices = @transform_2, window_bounds = array<i64: 1, 128>}, {pipeline_mode = #tpu.pipeline_mode<synchronous>, transform_indices = @transform_3, window_bounds = array<i64: 128, 128>}, {pipeline_mode = #tpu.pipeline_mode<synchronous>, transform_indices = @transform_4, window_bounds = array<i64: 1, 128>}, {pipeline_mode = #tpu.pipeline_mode<synchronous>, transform_indices = @transform_5, window_bounds = array<i64: 128, 4>}, {pipeline_mode = #tpu.pipeline_mode<synchronous>, transform_indices = @transform_6, window_bounds = array<i64: 1, 4>}, {transform_indices = @transform_7, window_bounds = array<i64: 8, 4>}]} {
    %c0 = arith.constant 0 : index
    %c0_0 = arith.constant 0 : index
    %0 = vector.load %arg3[%c0, %c0_0] : memref<1x128xf32, #tpu.memory_space<vmem>>, vector<1x128xf32>
    %c0_1 = arith.constant 0 : index
    %c0_2 = arith.constant 0 : index
    %1 = vector.load %arg5[%c0_1, %c0_2] : memref<1x128xf32, #tpu.memory_space<vmem>>, vector<1x128xf32>
    %c0_3 = arith.constant 0 : index
    %c0_4 = arith.constant 0 : index
    %2 = vector.load %arg7[%c0_3, %c0_4] : memref<1x4xf32, #tpu.memory_space<vmem>>, vector<1x4xf32>
    %c0_5 = arith.constant 0 : index
    %c0_6 = arith.constant 0 : index
    %3 = vector.load %arg1[%c0_5, %c0_6] : memref<8x32xf32, #tpu.memory_space<vmem>>, vector<8x32xf32>
    %c0_7 = arith.constant 0 : index
    %c0_8 = arith.constant 0 : index
    %4 = vector.load %arg2[%c0_7, %c0_8] : memref<32x128xf32, #tpu.memory_space<vmem>>, vector<32x128xf32>
    %cst = arith.constant dense<0.000000e+00> : vector<8x128xf32>
    %5 = tpu.matmul %3, %4, %cst {dimension_numbers = #tpu.dot_dimension_numbers<[1], [0], [0], [1], [0, 0, 1, 1], [], []>} : vector<8x32xf32>, vector<32x128xf32>, vector<8x128xf32> -> vector<8x128xf32>
    %6 = vector.broadcast %0 : vector<1x128xf32> to vector<8x128xf32>
    %7 = arith.addf %5, %6 : vector<8x128xf32>
    %cst_9 = arith.constant 0.000000e+00 : f32
    %8 = vector.broadcast %cst_9 : f32 to vector<8x128xf32>
    %9 = arith.maximumf %7, %8 : vector<8x128xf32>
    %c0_10 = arith.constant 0 : index
    %c0_11 = arith.constant 0 : index
    %10 = vector.load %arg4[%c0_10, %c0_11] : memref<128x128xf32, #tpu.memory_space<vmem>>, vector<128x128xf32>
    %cst_12 = arith.constant dense<0.000000e+00> : vector<8x128xf32>
    %11 = tpu.matmul %9, %10, %cst_12 {dimension_numbers = #tpu.dot_dimension_numbers<[1], [0], [0], [1], [0, 0, 1, 1], [], []>} : vector<8x128xf32>, vector<128x128xf32>, vector<8x128xf32> -> vector<8x128xf32>
    %12 = vector.broadcast %1 : vector<1x128xf32> to vector<8x128xf32>
    %13 = arith.addf %11, %12 : vector<8x128xf32>
    %cst_13 = arith.constant 0.000000e+00 : f32
    %14 = vector.broadcast %cst_13 : f32 to vector<8x128xf32>
    %15 = arith.maximumf %13, %14 : vector<8x128xf32>
    %c0_14 = arith.constant 0 : index
    %c0_15 = arith.constant 0 : index
    %16 = vector.load %arg6[%c0_14, %c0_15] : memref<128x4xf32, #tpu.memory_space<vmem>>, vector<128x4xf32>
    %cst_16 = arith.constant dense<0.000000e+00> : vector<8x4xf32>
    %17 = tpu.matmul %15, %16, %cst_16 {dimension_numbers = #tpu.dot_dimension_numbers<[1], [0], [0], [1], [0, 0, 1, 1], [], []>} : vector<8x128xf32>, vector<128x4xf32>, vector<8x4xf32> -> vector<8x4xf32>
    %18 = vector.broadcast %2 : vector<1x4xf32> to vector<8x4xf32>
    %19 = arith.addf %17, %18 : vector<8x4xf32>
    %c0_17 = arith.constant 0 : index
    %c0_18 = arith.constant 0 : index
    %20 = vector.load %arg8[%c0_17, %c0_18] : memref<8x4xf32, #tpu.memory_space<vmem>>, vector<8x4xf32>
    tpu.vector_store %arg8[%c0_17, %c0_18], %19 {strides = array<i32>} : memref<8x4xf32, #tpu.memory_space<vmem>>, vector<8x4xf32>,
    return
  }
  func.func @transform_0(%arg0: i32) -> (i32, i32) {
    %c0_i32 = arith.constant 0 : i32
    %c0_i32_0 = arith.constant 0 : i32
    return %arg0, %c0_i32 : i32, i32
  }
  func.func @transform_1(%arg0: i32) -> (i32, i32) {
    %c0_i32 = arith.constant 0 : i32
    %c0_i32_0 = arith.constant 0 : i32
    %c0_i32_1 = arith.constant 0 : i32
    return %c0_i32, %c0_i32_0 : i32, i32
  }
  func.func @transform_2(%arg0: i32) -> (i32, i32) {
    %c0_i32 = arith.constant 0 : i32
    %c0_i32_0 = arith.constant 0 : i32
    %c0_i32_1 = arith.constant 0 : i32
    return %c0_i32, %c0_i32_0 : i32, i32
  }
  func.func @transform_3(%arg0: i32) -> (i32, i32) {
    %c0_i32 = arith.constant 0 : i32
    %c0_i32_0 = arith.constant 0 : i32
    %c0_i32_1 = arith.constant 0 : i32
    return %c0_i32, %c0_i32_0 : i32, i32
  }
  func.func @transform_4(%arg0: i32) -> (i32, i32) {
    %c0_i32 = arith.constant 0 : i32
    %c0_i32_0 = arith.constant 0 : i32
    %c0_i32_1 = arith.constant 0 : i32
    return %c0_i32, %c0_i32_0 : i32, i32
  }
  func.func @transform_5(%arg0: i32) -> (i32, i32) {
    %c0_i32 = arith.constant 0 : i32
    %c0_i32_0 = arith.constant 0 : i32
    %c0_i32_1 = arith.constant 0 : i32
    return %c0_i32, %c0_i32_0 : i32, i32
  }
  func.func @transform_6(%arg0: i32) -> (i32, i32) {
    %c0_i32 = arith.constant 0 : i32
    %c0_i32_0 = arith.constant 0 : i32
    %c0_i32_1 = arith.constant 0 : i32
    return %c0_i32, %c0_i32_0 : i32, i32
  }
  func.func @transform_7(%arg0: i32) -> (i32, i32) {
    %c0_i32 = arith.constant 0 : i32
    %c0_i32_0 = arith.constant 0 : i32
    return %arg0, %c0_i32 : i32, i32
  }
}

</mosaic_0001>

<llo_original>
// kernel: tpu_custom_call.1
$region0: #{tpu_custom_call.1}
  #allocation0 [shape = 'u32[]', space=smem, size = 0x4, offset = 0x4, fixed_abs, tag = 'smem constant byte address 0x4 - core index']
  #allocation1 [shape = 'u32[144,128]{1,0:T(1,128)}', space=vmem, size = 0x12000, scoped, tag = 'internal scratch']
  %s0 = inlined_call_operand.vmem [shape: f32[8,32], index: 0, kind: input, shape index: {}]
  %s1 = inlined_call_operand.hbm [shape: f32[32,128], index: 1, kind: input, shape index: {}]
  %s2 = inlined_call_operand.vmem [shape: f32[1,128], index: 2, kind: input, shape index: {}]
  %s3 = inlined_call_operand.vmem [shape: f32[128,128], index: 3, kind: input, shape index: {}]
  %s4 = inlined_call_operand.vmem [shape: f32[1,128], index: 4, kind: input, shape index: {}]
  %s5 = inlined_call_operand.vmem [shape: f32[128,4], index: 5, kind: input, shape index: {}]
  %s6 = inlined_call_operand.vmem [shape: f32[1,4], index: 6, kind: input, shape index: {}]
  %s7 = inlined_call_operand.vmem [shape: f32[8,4], index: 7, kind: output, shape index: {}]
  %s8 = sld [smem:[#allocation0]]
  $region42: #{tpu_custom_call.1} parent=0
    _
  %s10 = ssub.s32 1, %s8
  %s11 = scalar_select 0, %s10, %s8
  $region1: #{tpu_custom_call.1} parent=0
    #allocation2 [shape = 'u8[16384]{0}', space=vmem, size = 0x4000, scoped, tag = 'input window, operand 1, single buffered']
    #allocation3 [shape = 's32[1]{0}', space=sflag, size = 0x4, scoped, tag = 'scoped memory for tpu_custom_call.1']
    %12 = vsyncpa [#allocation3], 0
    // Predicated region
    $region2: #{tpu_custom_call.1} parent=1 // pred_check
      _
    $region3: #{tpu_custom_call.1} parent=1 // pred_check_branch
      %14 = sbr.rel (0) target = $region5
    $region4: #{tpu_custom_call.1} parent=1 // pred_region
      _
    $region5: #{tpu_custom_call.1} parent=1 // pred_fallthru
      _
    // Predicated region
    $region6: #{tpu_custom_call.1} parent=1 // pred_check
      _
    $region7: #{tpu_custom_call.1} parent=1 // pred_check_branch
      %16 = sbr.rel (0) target = $region9
    $region8: #{tpu_custom_call.1} parent=1 // pred_region
      %s18 = ssub.s32 512, 512
      %19 = vsyncadd [#allocation3], %s18
      %s20 = sshll.u32 [#allocation2], 4
      %s21 = int_to_ptr.vmem [resolvable:$true] %s20
      %26 = dma.hbm_to_vmem [thread:$0]  %s1, 512, %s21, [#allocation3], 128, 128, 8
    $region9: #{tpu_custom_call.1} parent=1 // pred_fallthru
      _
    // Predicated region
    $region10: #{tpu_custom_call.1} parent=1 // pred_check
      _
    $region11: #{tpu_custom_call.1} parent=1 // pred_check_branch
      %28 = sbr.rel (0) target = $region13
    $region12: #{tpu_custom_call.1} parent=1 // pred_region
      _
    $region13: #{tpu_custom_call.1} parent=1 // pred_fallthru
      _
    // Predicated region
    $region14: #{tpu_custom_call.1} parent=1 // pred_check
      _
    $region15: #{tpu_custom_call.1} parent=1 // pred_check_branch
      %30 = sbr.rel (0) target = $region17
    $region16: #{tpu_custom_call.1} parent=1 // pred_region
      _
    $region17: #{tpu_custom_call.1} parent=1 // pred_fallthru
      _
    // Predicated region
    $region18: #{tpu_custom_call.1} parent=1 // pred_check
      _
    $region19: #{tpu_custom_call.1} parent=1 // pred_check_branch
      %32 = sbr.rel (0) target = $region21
    $region20: #{tpu_custom_call.1} parent=1 // pred_region
      _
    $region21: #{tpu_custom_call.1} parent=1 // pred_fallthru
      _
    // Predicated region
    $region22: #{tpu_custom_call.1} parent=1 // pred_check
      _
    $region23: #{tpu_custom_call.1} parent=1 // pred_check_branch
      %34 = sbr.rel (0) target = $region25
    $region24: #{tpu_custom_call.1} parent=1 // pred_region
      _
    $region25: #{tpu_custom_call.1} parent=1 // pred_fallthru
      _
    // Predicated region
    $region26: #{tpu_custom_call.1} parent=1 // pred_check
      _
    $region27: #{tpu_custom_call.1} parent=1 // pred_check_branch
      %36 = sbr.rel (0) target = $region29
    $region28: #{tpu_custom_call.1} parent=1 // pred_region
      _
    $region29: #{tpu_custom_call.1} parent=1 // pred_fallthru
      _
    // Predicated region
    $region30: #{tpu_custom_call.1} parent=1 // pred_check
      _
    $region31: #{tpu_custom_call.1} parent=1 // pred_check_branch
      %38 = sbr.rel (0) target = $region33
    $region32: #{tpu_custom_call.1} parent=1 // pred_region
      %39 = dma.done [#allocation3], 512
    $region33: #{tpu_custom_call.1} parent=1 // pred_fallthru
      _
    %v40 = vld [vmem:[%s2] sm:$0x1]
    %v41 = vld [vmem:[%s4] sm:$0x1]
    %v42 = vld [vmem:[%s6] sm:$0x1]
    %v43 = vld [vmem:[%s0] sm:$0xff]
    %v44 = vld [vmem:[#allocation2] sm:$0xff]
    %v45 = vld [vmem:[#allocation2 + $0x8] sm:$0xff]
    %v46 = vld [vmem:[#allocation2 + $0x10] sm:$0xff]
    %v47 = vld [vmem:[#allocation2 + $0x18] sm:$0xff]
    %v49 = vlaneseq
    %v50 = vshrl.u32 %v49, 7
    %v51 = vsub.s32 0, %v50
    %v52 = vrot.slane %v40, %v51
    %vm54 = vcmask 261120
    %v56 = vsel %vm54, %v43, 0
    %58 = vmatprep.subr.mxu0 0.0
    %59 = vmatpush1.msra.mxu0 %v44
    %60 = vmatprep.subr.mxu0 0.0
    %61 = vmatpush1.msra.mxu0 %v45
    %62 = vmatprep.subr.mxu0 0.0
    %63 = vmatpush1.msra.mxu0 %v46
    %64 = vmatprep.subr.mxu0 0.0
    %65 = vmatpush1.msra.mxu0 %v47
    %66 = vmatprep.subr.mxu0 0.0
    %67 = vmatpush1.msra.mxu0 0.0
    %68 = vmatprep.subr.mxu0 0.0
    %69 = vmatpush1.msra.mxu0 0.0
    %70 = vmatprep.subr.mxu0 0.0
    %71 = vmatpush1.msra.mxu0 0.0
    %72 = vmatprep.subr.mxu0 0.0
    %73 = vmatpush1.msra.mxu0 0.0
    %74 = vmatprep.subr.mxu0 0.0
    %75 = vmatpush1.msra.mxu0 0.0
    %76 = vmatprep.subr.mxu0 0.0
    %77 = vmatpush1.msra.mxu0 0.0
    %78 = vmatprep.subr.mxu0 0.0
    %79 = vmatpush1.msra.mxu0 0.0
    %80 = vmatprep.subr.mxu0 0.0
    %81 = vmatpush1.msra.mxu0 0.0
    %82 = vmatprep.subr.mxu0 0.0
    %83 = vmatpush1.msra.mxu0 0.0
    %84 = vmatprep.subr.mxu0 0.0
    %85 = vmatpush1.msra.mxu0 0.0
    %86 = vmatprep.subr.mxu0 0.0
    %87 = vmatpush1.msra.mxu0 0.0
    %88 = vmatprep.subr.mxu0 0.0
    %89 = vmatpush1.msra.mxu0 0.0
    %90 = vmatprep.subr.mxu0 0.0
    %91 = vmatpush1.msra.mxu0 0.0
    %92 = vmatprep.subr.mxu0 0.0
    %93 = vmatpush1.msra.mxu0 0.0
    %94 = vmatprep.subr.mxu0 0.0
    %95 = vmatpush1.msra.mxu0 0.0
    %96 = vmatprep.subr.mxu0 0.0
    %97 = vmatpush1.msra.mxu0 0.0
    %98 = vmatprep.subr.mxu0 0.0
    %99 = vmatpush1.msra.mxu0 0.0
    %100 = vmatprep.subr.mxu0 0.0
    %101 = vmatpush1.msra.mxu0 0.0
    %102 = vmatprep.subr.mxu0 0.0
    %103 = vmatpush1.msra.mxu0 0.0
    %104 = vmatprep.subr.mxu0 0.0
    %105 = vmatpush1.msra.mxu0 0.0
    %106 = vmatprep.subr.mxu0 0.0
    %107 = vmatpush1.msra.mxu0 0.0
    %108 = vmatprep.subr.mxu0 0.0
    %109 = vmatpush1.msra.mxu0 0.0
    %110 = vmatprep.subr.mxu0 0.0
    %111 = vmatpush1.msra.mxu0 0.0
    %112 = vmatprep.subr.mxu0 0.0
    %113 = vmatpush1.msra.mxu0 0.0
    %114 = vmatprep.subr.mxu0 0.0
    %115 = vmatpush1.msra.mxu0 0.0
    %116 = vmatprep.subr.mxu0 0.0
    %117 = vmatpush1.msra.mxu0 0.0
    %118 = vmatprep.subr.mxu0 0.0
    %119 = vmatpush1.msra.mxu0 0.0
    %120 = vmatprep.subr.mxu0 0.0
    %121 = vmatpush1.msra.mxu0 0.0
    %122 = vmatprep.mubr.f32.mxu0 0.0
    %123 = vmatmul.mubr.f32.gmra.mrb[0].mxu0 %v56
    %v124 = vpop.f32.mrb[0].mxu0
    %v125 = vadd.f32 %v52, %v124
    %v126 = vpop.f32.mrb[0].mxu0
    %127 = vdwg.mxu0
    %v128 = vmax.f32 %v125, 0.0
    %v129 = vld [vmem:[%s3] sm:$0xff]
    %v130 = vld [vmem:[%s3 + $0x8] sm:$0xff]
    %v131 = vld [vmem:[%s3 + $0x10] sm:$0xff]
    %v132 = vld [vmem:[%s3 + $0x18] sm:$0xff]
    %v133 = vld [vmem:[%s3 + $0x20] sm:$0xff]
    %v134 = vld [vmem:[%s3 + $0x28] sm:$0xff]
    %v135 = vld [vmem:[%s3 + $0x30] sm:$0xff]
    %v136 = vld [vmem:[%s3 + $0x38] sm:$0xff]
    %v137 = vld [vmem:[%s3 + $0x40] sm:$0xff]
    %v138 = vld [vmem:[%s3 + $0x48] sm:$0xff]
    %v139 = vld [vmem:[%s3 + $0x50] sm:$0xff]
    %v140 = vld [vmem:[%s3 + $0x58] sm:$0xff]
    %v141 = vld [vmem:[%s3 + $0x60] sm:$0xff]
    %v142 = vld [vmem:[%s3 + $0x68] sm:$0xff]
    %v143 = vld [vmem:[%s3 + $0x70] sm:$0xff]
    %v144 = vld [vmem:[%s3 + $0x78] sm:$0xff]
    %v146 = vlaneseq
    %v147 = vshrl.u32 %v146, 7
    %v148 = vsub.s32 0, %v147
    %v149 = vrot.slane %v41, %v148
    %151 = vmatprep.subr.mxu0 0.0
    %152 = vmatpush1.msra.mxu0 %v129
    %153 = vmatprep.subr.mxu0 0.0
    %154 = vmatpush1.msra.mxu0 %v130
    %155 = vmatprep.subr.mxu0 0.0
    %156 = vmatpush1.msra.mxu0 %v131
    %157 = vmatprep.subr.mxu0 0.0
    %158 = vmatpush1.msra.mxu0 %v132
    %159 = vmatprep.subr.mxu0 0.0
    %160 = vmatpush1.msra.mxu0 %v133
    %161 = vmatprep.subr.mxu0 0.0
    %162 = vmatpush1.msra.mxu0 %v134
    %163 = vmatprep.subr.mxu0 0.0
    %164 = vmatpush1.msra.mxu0 %v135
    %165 = vmatprep.subr.mxu0 0.0
    %166 = vmatpush1.msra.mxu0 %v136
    %167 = vmatprep.subr.mxu0 0.0
    %168 = vmatpush1.msra.mxu0 %v137
    %169 = vmatprep.subr.mxu0 0.0
    %170 = vmatpush1.msra.mxu0 %v138
    %171 = vmatprep.subr.mxu0 0.0
    %172 = vmatpush1.msra.mxu0 %v139
    %173 = vmatprep.subr.mxu0 0.0
    %174 = vmatpush1.msra.mxu0 %v140
    %175 = vmatprep.subr.mxu0 0.0
    %176 = vmatpush1.msra.mxu0 %v141
    %177 = vmatprep.subr.mxu0 0.0
    %178 = vmatpush1.msra.mxu0 %v142
    %179 = vmatprep.subr.mxu0 0.0
    %180 = vmatpush1.msra.mxu0 %v143
    %181 = vmatprep.subr.mxu0 0.0
    %182 = vmatpush1.msra.mxu0 %v144
    %183 = vmatprep.subr.mxu0 0.0
    %184 = vmatpush1.msra.mxu0 0.0
    %185 = vmatprep.subr.mxu0 0.0
    %186 = vmatpush1.msra.mxu0 0.0
    %187 = vmatprep.subr.mxu0 0.0
    %188 = vmatpush1.msra.mxu0 0.0
    %189 = vmatprep.subr.mxu0 0.0
    %190 = vmatpush1.msra.mxu0 0.0
    %191 = vmatprep.subr.mxu0 0.0
    %192 = vmatpush1.msra.mxu0 0.0
    %193 = vmatprep.subr.mxu0 0.0
    %194 = vmatpush1.msra.mxu0 0.0
    %195 = vmatprep.subr.mxu0 0.0
    %196 = vmatpush1.msra.mxu0 0.0
    %197 = vmatprep.subr.mxu0 0.0
    %198 = vmatpush1.msra.mxu0 0.0
    %199 = vmatprep.subr.mxu0 0.0
    %200 = vmatpush1.msra.mxu0 0.0
    %201 = vmatprep.subr.mxu0 0.0
    %202 = vmatpush1.msra.mxu0 0.0
    %203 = vmatprep.subr.mxu0 0.0
    %204 = vmatpush1.msra.mxu0 0.0
    %205 = vmatprep.subr.mxu0 0.0
    %206 = vmatpush1.msra.mxu0 0.0
    %207 = vmatprep.subr.mxu0 0.0
    %208 = vmatpush1.msra.mxu0 0.0
    %209 = vmatprep.subr.mxu0 0.0
    %210 = vmatpush1.msra.mxu0 0.0
    %211 = vmatprep.subr.mxu0 0.0
    %212 = vmatpush1.msra.mxu0 0.0
    %213 = vmatprep.subr.mxu0 0.0
    %214 = vmatpush1.msra.mxu0 0.0
    %215 = vmatprep.mubr.f32.mxu0 0.0
    %216 = vmatmul.mubr.f32.gmra.mrb[0].mxu0 %v128
    %v217 = vpop.f32.mrb[0].mxu0
    %v218 = vadd.f32 %v149, %v217
    %v219 = vpop.f32.mrb[0].mxu0
    %220 = vdwg.mxu0
    %v221 = vmax.f32 %v218, 0.0
    %v222 = vld [vmem:[%s5] sm:$0xff]
    %v223 = vld [vmem:[%s5 + $0x8] sm:$0xff]
    %v224 = vld [vmem:[%s5 + $0x10] sm:$0xff]
    %v225 = vld [vmem:[%s5 + $0x18] sm:$0xff]
    %v226 = vld [vmem:[%s5 + $0x20] sm:$0xff]
    %v227 = vld [vmem:[%s5 + $0x28] sm:$0xff]
    %v228 = vld [vmem:[%s5 + $0x30] sm:$0xff]
    %v229 = vld [vmem:[%s5 + $0x38] sm:$0xff]
    %v230 = vld [vmem:[%s5 + $0x40] sm:$0xff]
    %v231 = vld [vmem:[%s5 + $0x48] sm:$0xff]
    %v232 = vld [vmem:[%s5 + $0x50] sm:$0xff]
    %v233 = vld [vmem:[%s5 + $0x58] sm:$0xff]
    %v234 = vld [vmem:[%s5 + $0x60] sm:$0xff]
    %v235 = vld [vmem:[%s5 + $0x68] sm:$0xff]
    %v236 = vld [vmem:[%s5 + $0x70] sm:$0xff]
    %v237 = vld [vmem:[%s5 + $0x78] sm:$0xff]
    %v239 = vlaneseq
    %v240 = vshrl.u32 %v239, 7
    %v241 = vsub.s32 0, %v240
    %v242 = vrot.slane %v42, %v241
    %244 = vmatprep.subr.mxu0 0.0
    %245 = vmatpush1.msra.mxu0 %v222
    %246 = vmatprep.subr.mxu0 0.0
    %247 = vmatpush1.msra.mxu0 %v223
    %248 = vmatprep.subr.mxu0 0.0
    %249 = vmatpush1.msra.mxu0 %v224
    %250 = vmatprep.subr.mxu0 0.0
    %251 = vmatpush1.msra.mxu0 %v225
    %252 = vmatprep.subr.mxu0 0.0
    %253 = vmatpush1.msra.mxu0 %v226
    %254 = vmatprep.subr.mxu0 0.0
    %255 = vmatpush1.msra.mxu0 %v227
    %256 = vmatprep.subr.mxu0 0.0
    %257 = vmatpush1.msra.mxu0 %v228
    %258 = vmatprep.subr.mxu0 0.0
    %259 = vmatpush1.msra.mxu0 %v229
    %260 = vmatprep.subr.mxu0 0.0
    %261 = vmatpush1.msra.mxu0 %v230
    %262 = vmatprep.subr.mxu0 0.0
    %263 = vmatpush1.msra.mxu0 %v231
    %264 = vmatprep.subr.mxu0 0.0
    %265 = vmatpush1.msra.mxu0 %v232
    %266 = vmatprep.subr.mxu0 0.0
    %267 = vmatpush1.msra.mxu0 %v233
    %268 = vmatprep.subr.mxu0 0.0
    %269 = vmatpush1.msra.mxu0 %v234
    %270 = vmatprep.subr.mxu0 0.0
    %271 = vmatpush1.msra.mxu0 %v235
    %272 = vmatprep.subr.mxu0 0.0
    %273 = vmatpush1.msra.mxu0 %v236
    %274 = vmatprep.subr.mxu0 0.0
    %275 = vmatpush1.msra.mxu0 %v237
    %276 = vmatprep.subr.mxu0 0.0
    %277 = vmatpush1.msra.mxu0 0.0
    %278 = vmatprep.subr.mxu0 0.0
    %279 = vmatpush1.msra.mxu0 0.0
    %280 = vmatprep.subr.mxu0 0.0
    %281 = vmatpush1.msra.mxu0 0.0
    %282 = vmatprep.subr.mxu0 0.0
    %283 = vmatpush1.msra.mxu0 0.0
    %284 = vmatprep.subr.mxu0 0.0
    %285 = vmatpush1.msra.mxu0 0.0
    %286 = vmatprep.subr.mxu0 0.0
    %287 = vmatpush1.msra.mxu0 0.0
    %288 = vmatprep.subr.mxu0 0.0
    %289 = vmatpush1.msra.mxu0 0.0
    %290 = vmatprep.subr.mxu0 0.0
    %291 = vmatpush1.msra.mxu0 0.0
    %292 = vmatprep.subr.mxu0 0.0
    %293 = vmatpush1.msra.mxu0 0.0
    %294 = vmatprep.subr.mxu0 0.0
    %295 = vmatpush1.msra.mxu0 0.0
    %296 = vmatprep.subr.mxu0 0.0
    %297 = vmatpush1.msra.mxu0 0.0
    %298 = vmatprep.subr.mxu0 0.0
    %299 = vmatpush1.msra.mxu0 0.0
    %300 = vmatprep.subr.mxu0 0.0
    %301 = vmatpush1.msra.mxu0 0.0
    %302 = vmatprep.subr.mxu0 0.0
    %303 = vmatpush1.msra.mxu0 0.0
    %304 = vmatprep.subr.mxu0 0.0
    %305 = vmatpush1.msra.mxu0 0.0
    %306 = vmatprep.subr.mxu0 0.0
    %307 = vmatpush1.msra.mxu0 0.0
    %308 = vmatprep.mubr.f32.mxu0 0.0
    %309 = vmatmul.mubr.f32.gmra.mrb[0].mxu0 %v221
    %v310 = vpop.f32.mrb[0].mxu0
    %v311 = vadd.f32 %v242, %v310
    %v312 = vpop.f32.mrb[0].mxu0
    %313 = vdwg.mxu0
    %vm314 = vcmask 31744
    %315 = vst.msk [vmem:[%s7] sm:$0xff] %vm314, %v311
    // Predicated region
    $region34: #{tpu_custom_call.1} parent=1 // pred_check
      _
    $region35: #{tpu_custom_call.1} parent=1 // pred_check_branch
      %317 = sbr.rel (0) target = $region37
    $region36: #{tpu_custom_call.1} parent=1 // pred_region
      _
    $region37: #{tpu_custom_call.1} parent=1 // pred_fallthru
      _
    // Predicated region
    $region38: #{tpu_custom_call.1} parent=1 // pred_check
      _
    $region39: #{tpu_custom_call.1} parent=1 // pred_check_branch
      %319 = sbr.rel (0) target = $region41
    $region40: #{tpu_custom_call.1} parent=1 // pred_region
      _
    $region41: #{tpu_custom_call.1} parent=1 // pred_fallthru
      _
    %320 = vsyncpa [#allocation3], 1

</llo_original>
